<compile_context>
chip_gen: v6e
topology: v6e:2x2x1
jax: 0.10.0
libtpu: 0.0.40
codegen_flags: <defaults>
</compile_context>

<pallas_src>
import jax
import jax.numpy as jnp
from jax import lax
from jax.experimental import pallas as pl
from jax.experimental.pallas import tpu as pltpu


# --------------------------------- kernels ----------------------------------

def dag_linear_kernel(x_ref, m_ref, y_ref):
    # y = x @ M        x_ref: (TB, N), m_ref: (N, N), y_ref: (TB, N)
    y_ref[...] = jnp.dot(
        x_ref[...], m_ref[...],
        preferred_element_type=jnp.float32,
        precision=lax.Precision.HIGHEST,
    ).astype(y_ref.dtype)


def dag_mask_kernel(x_ref, m_ref, o_ref):
    # out[b, l, n] = M[l, n] * x[b, l]
    # x_ref: (TB, TL), m_ref: (TL, N), o_ref: (TB, TL, N)
    x = x_ref[...].astype(jnp.float32)
    m = m_ref[...].astype(jnp.float32)
    o_ref[...] = (x[:, :, None] * m[None, :, :]).astype(o_ref.dtype)


# --------------------------------- tiling ------------------------------------

def _round_down_mult(v, m):
    return (v // m) * m


def _physical_vmem_bytes():
    try:
        return int(pltpu.get_tpu_info().vmem_capacity_bytes)
    except Exception:
        return 64 << 20          # v7x per-TensorCore VMEM: smallest of all gens


def _vmem_limit_bytes():
    # Explicit scoped-VMEM limit: half of physical, so double-buffered tiles
    # plus the small x / M streams always fit (v5e/v6e: 64 MiB, v7x: 32 MiB).
    return min(_physical_vmem_bytes() // 2, 96 << 20)


def _linear_row_tile(batch, n, itemsize):
    # Memory-bound branch: ~1 MiB lane-dense blocks saturate the HBM roofline;
    # single block when the whole batch fits.
    target_bytes = 1 << 20
    rows = max(8, _round_down_mult(target_bytes // (n * itemsize), 8))
    return batch if batch <= rows else rows


def _mask_tiles(batch, n, out_itemsize, out_tile_budget):
    # Output block is (rb, lt, N); keep it <= out_tile_budget bytes.
    # x block is (rb, lt): rb must be a multiple of 8 (or == batch),
    # lt a multiple of 128 (or == N).
    rows = out_tile_budget // (n * n * out_itemsize)
    if batch <= rows:
        return batch, n                       # single row-block, full l extent
    if rows >= 8:
        return _round_down_mult(rows, 8), n   # tile rows only
    # Very large N: even 8 rows x (N, N) would blow the budget -> tile the
    # l dimension too instead of inflating the output block.
    rb = min(batch, 8)
    lt = max(128, _round_down_mult(out_tile_budget // (rb * n * out_itemsize), 128))
    return rb, min(lt, n)


# --------------------------------- wrapper -----------------------------------

def dag_layer_forward(x, A, b, z_mask=False):
    """Pallas implementation of Dag_Layer.forward(x, z_mask)."""
    B, n = x.shape
    assert A.shape == (n, n) and b.shape == (n,)
    out_dtype = x.dtype
    itemsize = jnp.dtype(out_dtype).itemsize
    # M = A + diag(b): tiny O(N^2) op, hoisted out of the per-step kernel.
    M = (A + jnp.diag(b)).astype(out_dtype)

    vmem_limit = _vmem_limit_bytes()

    if not z_mask:
        tb = _linear_row_tile(B, n, itemsize)
        return pl.pallas_call(
            dag_linear_kernel,
            out_shape=jax.ShapeDtypeStruct((B, n), out_dtype),
            grid=(pl.cdiv(B, tb),),
            in_specs=[
                pl.BlockSpec((tb, n), lambda i: (i, 0)),
                pl.BlockSpec((n, n), lambda i: (0, 0)),
            ],
            out_specs=pl.BlockSpec((tb, n), lambda i: (i, 0)),
            compiler_params=pltpu.CompilerParams(
                dimension_semantics=("parallel",),
                vmem_limit_bytes=vmem_limit),
        )(x, M)

    out_budget = vmem_limit // 4      # double-buffered output tile = half limit
    tb, tl = _mask_tiles(B, n, itemsize, out_budget)
    return pl.pallas_call(
        dag_mask_kernel,
        out_shape=jax.ShapeDtypeStruct((B, n, n), out_dtype),
        grid=(pl.cdiv(B, tb), pl.cdiv(n, tl)),
        in_specs=[
            pl.BlockSpec((tb, tl), lambda i, j: (i, j)),
            pl.BlockSpec((tl, n), lambda i, j: (j, 0)),
        ],
        out_specs=pl.BlockSpec((tb, tl, n), lambda i, j: (i, j, 0)),
        compiler_params=pltpu.CompilerParams(
            dimension_semantics=("parallel", "parallel"),
            vmem_limit_bytes=vmem_limit),
    )(x, M)


# ------------------------------ pure-JAX ref ---------------------------------

def reference_forward(x, A, b, z_mask=False):
    M = (A + jnp.diag(b)).astype(x.dtype)
    if z_mask:
        return jnp.einsum('ln,bl->bln', M, x)
    return jnp.dot(x, M, precision=lax.Precision.HIGHEST)   # F.linear(x, M.t())


# ---------------------------------- main -------------------------------------

if __name__ == "__main__":
    key = jax.random.PRNGKey(0)
    kA, kb, kx = jax.random.split(key, 3)

    n_features, batch = 128, 50        # batch deliberately not a tile multiple
    A = jax.random.normal(kA, (n_features, n_features), jnp.float32) * 0.1
    b = jax.random.normal(kb, (n_features,), jnp.float32)
    x = jax.random.normal(kx, (batch, n_features), jnp.float32)

    y = dag_layer_forward(x, A, b, z_mask=False)       # F.linear branch
    y_mask = dag_layer_forward(x, A, b, z_mask=True)   # einsum branch
    jax.block_until_ready((y, y_mask))

    ref_y = reference_forward(x, A, b, z_mask=False)
    ref_mask = reference_forward(x, A, b, z_mask=True)

    assert y.shape == (batch, n_features)
    assert y_mask.shape == (batch, n_features, n_features)
    assert jnp.allclose(y, ref_y, atol=1e-3, rtol=1e-3)
    assert jnp.allclose(y_mask, ref_mask, atol=1e-5, rtol=1e-5)

    print("KERNEL_OK")
</pallas_src>

<mosaic_0001>
module attributes {stable_mosaic.version = 11 : i64} {
  func.func @dag_linear_kernel(%arg0: i32, %arg1: memref<50x128xf32, #tpu.memory_space<vmem>>, %arg2: memref<128x128xf32, #tpu.memory_space<vmem>>, %arg3: memref<50x128xf32, #tpu.memory_space<vmem>>) attributes {dimension_semantics = [#tpu.dimension_semantics<parallel>], iteration_bounds = array<i64: 1>, scalar_prefetch = 0 : i64, scratch_operands = 0 : i64, tpu.core_type = #tpu.core_type<tc>, window_params = [{transform_indices = @transform_0, window_bounds = array<i64: 50, 128>}, {pipeline_mode = #tpu.pipeline_mode<synchronous>, transform_indices = @transform_1, window_bounds = array<i64: 128, 128>}, {transform_indices = @transform_2, window_bounds = array<i64: 50, 128>}]} {
    %c0 = arith.constant 0 : index
    %c0_0 = arith.constant 0 : index
    %0 = vector.load %arg1[%c0, %c0_0] : memref<50x128xf32, #tpu.memory_space<vmem>>, vector<50x128xf32>
    %c0_1 = arith.constant 0 : index
    %c0_2 = arith.constant 0 : index
    %1 = vector.load %arg2[%c0_1, %c0_2] : memref<128x128xf32, #tpu.memory_space<vmem>>, vector<128x128xf32>
    %cst = arith.constant dense<0.000000e+00> : vector<50x128xf32>
    %2 = tpu.matmul %0, %1, %cst {dimension_numbers = #tpu.dot_dimension_numbers<[1], [0], [0], [1], [0, 0, 1, 1], [], []>, precision = #tpu.contract_precision<fp32>} : vector<50x128xf32>, vector<128x128xf32>, vector<50x128xf32> -> vector<50x128xf32>
    %c0_3 = arith.constant 0 : index
    %c0_4 = arith.constant 0 : index
    %3 = vector.load %arg3[%c0_3, %c0_4] : memref<50x128xf32, #tpu.memory_space<vmem>>, vector<50x128xf32>
    tpu.vector_store %arg3[%c0_3, %c0_4], %2 {strides = array<i32>} : memref<50x128xf32, #tpu.memory_space<vmem>>, vector<50x128xf32>,
    return
  }
  func.func @transform_0(%arg0: i32) -> (i32, i32) {
    %c0_i32 = arith.constant 0 : i32
    %c0_i32_0 = arith.constant 0 : i32
    return %arg0, %c0_i32 : i32, i32
  }
  func.func @transform_1(%arg0: i32) -> (i32, i32) {
    %c0_i32 = arith.constant 0 : i32
    %c0_i32_0 = arith.constant 0 : i32
    %c0_i32_1 = arith.constant 0 : i32
    return %c0_i32, %c0_i32_0 : i32, i32
  }
  func.func @transform_2(%arg0: i32) -> (i32, i32) {
    %c0_i32 = arith.constant 0 : i32
    %c0_i32_0 = arith.constant 0 : i32
    return %arg0, %c0_i32 : i32, i32
  }
}

</mosaic_0001>

<llo_original>
// kernel: tpu_custom_call.1
$region0: #{tpu_custom_call.1}
  #allocation0 [shape = 'u32[]', space=smem, size = 0x4, offset = 0x4, fixed_abs, tag = 'smem constant byte address 0x4 - core index']
  #allocation1 [shape = 'u32[144,128]{1,0:T(1,128)}', space=vmem, size = 0x12000, scoped, tag = 'internal scratch']
  %s0 = inlined_call_operand.hbm [shape: f32[50,128], index: 0, kind: input, shape index: {}]
  %s1 = inlined_call_operand.hbm [shape: f32[128,128], index: 1, kind: input, shape index: {}]
  %s2 = inlined_call_operand.hbm [shape: f32[50,128], index: 2, kind: output, shape index: {}]
  %s3 = sld [smem:[#allocation0]]
  $region26: #{tpu_custom_call.1} parent=0
    _
  %s5 = ssub.s32 1, %s3
  %s6 = scalar_select 0, %s5, %s3
  $region1: #{tpu_custom_call.1} parent=0
    #allocation2 [shape = 'u8[28672]{0}', space=vmem, size = 0x7000, scoped, tag = 'input window, operand 0, single buffered']
    #allocation3 [shape = 's32[1]{0}', space=sflag, size = 0x4, scoped, tag = 'scoped memory for tpu_custom_call.1']
    #allocation4 [shape = 's32[1]{0}', space=sflag, size = 0x4, scoped, tag = 'scoped memory for tpu_custom_call.1']
    #allocation5 [shape = 'u8[65536]{0}', space=vmem, size = 0x10000, scoped, tag = 'input window, operand 1, single buffered']
    #allocation6 [shape = 's32[1]{0}', space=sflag, size = 0x4, scoped, tag = 'scoped memory for tpu_custom_call.1']
    #allocation7 [shape = 'u8[28672]{0}', space=vmem, size = 0x7000, scoped, tag = 'output window, operand 0, single buffered']
    %7 = vsyncpa [#allocation3], 0
    %8 = vsyncpa [#allocation6], 0
    %9 = vsyncpa [#allocation4], 0
    // Predicated region
    $region2: #{tpu_custom_call.1} parent=1 // pred_check
      _
    $region3: #{tpu_custom_call.1} parent=1 // pred_check_branch
      %11 = sbr.rel (0) target = $region5
    $region4: #{tpu_custom_call.1} parent=1 // pred_region
      %s13 = ssub.s32 896, 896
      %14 = vsyncadd [#allocation3], %s13
      %s15 = sshll.u32 [#allocation2], 4
      %s16 = int_to_ptr.vmem [resolvable:$true] %s15
      %21 = dma.hbm_to_vmem [thread:$0]  %s0, 896, %s16, [#allocation3], 128, 128, 8
    $region5: #{tpu_custom_call.1} parent=1 // pred_fallthru
      _
    // Predicated region
    $region6: #{tpu_custom_call.1} parent=1 // pred_check
      _
    $region7: #{tpu_custom_call.1} parent=1 // pred_check_branch
      %23 = sbr.rel (0) target = $region9
    $region8: #{tpu_custom_call.1} parent=1 // pred_region
      %s25 = ssub.s32 2048, 2048
      %26 = vsyncadd [#allocation6], %s25
      %s27 = sshll.u32 [#allocation5], 4
      %s28 = int_to_ptr.vmem [resolvable:$true] %s27
      %33 = dma.hbm_to_vmem [thread:$0]  %s1, 2048, %s28, [#allocation6], 128, 128, 8
    $region9: #{tpu_custom_call.1} parent=1 // pred_fallthru
      _
    // Predicated region
    $region10: #{tpu_custom_call.1} parent=1 // pred_check
      _
    $region11: #{tpu_custom_call.1} parent=1 // pred_check_branch
      %35 = sbr.rel (0) target = $region13
    $region12: #{tpu_custom_call.1} parent=1 // pred_region
      %36 = dma.done [#allocation3], 896
    $region13: #{tpu_custom_call.1} parent=1 // pred_fallthru
      _
    // Predicated region
    $region14: #{tpu_custom_call.1} parent=1 // pred_check
      _
    $region15: #{tpu_custom_call.1} parent=1 // pred_check_branch
      %38 = sbr.rel (0) target = $region17
    $region16: #{tpu_custom_call.1} parent=1 // pred_region
      %39 = dma.done [#allocation6], 2048
    $region17: #{tpu_custom_call.1} parent=1 // pred_fallthru
      _
    %v40 = vld [vmem:[#allocation2] sm:$0xff]
    %v41 = vld [vmem:[#allocation2 + $0x8] sm:$0xff]
    %v42 = vld [vmem:[#allocation2 + $0x10] sm:$0xff]
    %v43 = vld [vmem:[#allocation2 + $0x18] sm:$0xff]
    %v44 = vld [vmem:[#allocation2 + $0x20] sm:$0xff]
    %v45 = vld [vmem:[#allocation2 + $0x28] sm:$0xff]
    %v46 = vld [vmem:[#allocation2 + $0x30] sm:$0x3]
    %v47 = vld [vmem:[#allocation5] sm:$0xff]
    %v48 = vld [vmem:[#allocation5 + $0x8] sm:$0xff]
    %v49 = vld [vmem:[#allocation5 + $0x10] sm:$0xff]
    %v50 = vld [vmem:[#allocation5 + $0x18] sm:$0xff]
    %v51 = vld [vmem:[#allocation5 + $0x20] sm:$0xff]
    %v52 = vld [vmem:[#allocation5 + $0x28] sm:$0xff]
    %v53 = vld [vmem:[#allocation5 + $0x30] sm:$0xff]
    %v54 = vld [vmem:[#allocation5 + $0x38] sm:$0xff]
    %v55 = vld [vmem:[#allocation5 + $0x40] sm:$0xff]
    %v56 = vld [vmem:[#allocation5 + $0x48] sm:$0xff]
    %v57 = vld [vmem:[#allocation5 + $0x50] sm:$0xff]
    %v58 = vld [vmem:[#allocation5 + $0x58] sm:$0xff]
    %v59 = vld [vmem:[#allocation5 + $0x60] sm:$0xff]
    %v60 = vld [vmem:[#allocation5 + $0x68] sm:$0xff]
    %v61 = vld [vmem:[#allocation5 + $0x70] sm:$0xff]
    %v62 = vld [vmem:[#allocation5 + $0x78] sm:$0xff]
    %63 = vmatprep.subr.mxu0 0.0
    %v64 = vand.u32 %v62, 4294901760
    %65 = vmatpush1.msra.mxu0 %v64
    %66 = vmatprep.subr.mxu0 0.0
    %v67 = vand.u32 %v61, 4294901760
    %68 = vmatpush1.msra.mxu0 %v67
    %69 = vmatprep.subr.mxu0 0.0
    %v70 = vand.u32 %v60, 4294901760
    %71 = vmatpush1.msra.mxu0 %v70
    %72 = vmatprep.subr.mxu0 0.0
    %v73 = vand.u32 %v59, 4294901760
    %74 = vmatpush1.msra.mxu0 %v73
    %75 = vmatprep.subr.mxu0 0.0
    %v76 = vand.u32 %v58, 4294901760
    %77 = vmatpush1.msra.mxu0 %v76
    %78 = vmatprep.subr.mxu0 0.0
    %v79 = vand.u32 %v57, 4294901760
    %80 = vmatpush1.msra.mxu0 %v79
    %81 = vmatprep.subr.mxu0 0.0
    %v82 = vand.u32 %v56, 4294901760
    %83 = vmatpush1.msra.mxu0 %v82
    %84 = vmatprep.subr.mxu0 0.0
    %v85 = vand.u32 %v55, 4294901760
    %86 = vmatpush1.msra.mxu0 %v85
    %87 = vmatprep.subr.mxu0 0.0
    %v88 = vand.u32 %v54, 4294901760
    %89 = vmatpush1.msra.mxu0 %v88
    %90 = vmatprep.subr.mxu0 0.0
    %v91 = vand.u32 %v53, 4294901760
    %92 = vmatpush1.msra.mxu0 %v91
    %93 = vmatprep.subr.mxu0 0.0
    %v94 = vand.u32 %v52, 4294901760
    %95 = vmatpush1.msra.mxu0 %v94
    %96 = vmatprep.subr.mxu0 0.0
    %v97 = vand.u32 %v51, 4294901760
    %98 = vmatpush1.msra.mxu0 %v97
    %99 = vmatprep.subr.mxu0 0.0
    %v100 = vand.u32 %v50, 4294901760
    %101 = vmatpush1.msra.mxu0 %v100
    %102 = vmatprep.subr.mxu0 0.0
    %v103 = vand.u32 %v49, 4294901760
    %104 = vmatpush1.msra.mxu0 %v103
    %105 = vmatprep.subr.mxu0 0.0
    %v106 = vand.u32 %v48, 4294901760
    %107 = vmatpush1.msra.mxu0 %v106
    %108 = vmatprep.subr.mxu0 0.0
    %v109 = vand.u32 %v47, 4294901760
    %110 = vmatpush1.msra.mxu0 %v109
    %111 = vmatprep.subr.mxu0 0.0
    %112 = vmatpush2.msra.mxu0 0.0
    %113 = vmatprep.subr.mxu0 0.0
    %114 = vmatpush2.msra.mxu0 0.0
    %115 = vmatprep.subr.mxu0 0.0
    %116 = vmatpush2.msra.mxu0 0.0
    %117 = vmatprep.subr.mxu0 0.0
    %118 = vmatpush2.msra.mxu0 0.0
    %119 = vmatprep.subr.mxu0 0.0
    %120 = vmatpush2.msra.mxu0 0.0
    %121 = vmatprep.subr.mxu0 0.0
    %122 = vmatpush2.msra.mxu0 0.0
    %123 = vmatprep.subr.mxu0 0.0
    %124 = vmatpush2.msra.mxu0 0.0
    %125 = vmatprep.subr.mxu0 0.0
    %126 = vmatpush2.msra.mxu0 0.0
    %127 = vmatprep.subr.mxu0 0.0
    %128 = vmatpush2.msra.mxu0 0.0
    %129 = vmatprep.subr.mxu0 0.0
    %130 = vmatpush2.msra.mxu0 0.0
    %131 = vmatprep.subr.mxu0 0.0
    %132 = vmatpush2.msra.mxu0 0.0
    %133 = vmatprep.subr.mxu0 0.0
    %134 = vmatpush2.msra.mxu0 0.0
    %135 = vmatprep.subr.mxu0 0.0
    %136 = vmatpush2.msra.mxu0 0.0
    %137 = vmatprep.subr.mxu0 0.0
    %138 = vmatpush2.msra.mxu0 0.0
    %139 = vmatprep.subr.mxu0 0.0
    %140 = vmatpush2.msra.mxu0 0.0
    %141 = vmatprep.subr.mxu0 0.0
    %142 = vmatpush2.msra.mxu0 0.0
    %143 = vmatprep.mubr.f32.mxu0 0.0
    %v144 = vand.u32 %v40, 4294901760
    %v145 = vsub.f32 %v40, %v144
    %v146 = vand.u32 %v145, 4294901760
    %v147 = vsub.f32 %v145, %v146
    %v148 = vand.u32 %v147, 4294901760
    %149 = vmatmul.mubr.f32.gmra.mxu0 %v148
    %v150 = vpop.f32.mrf.mxu0
    %v151 = vadd.f32 0.0, %v150
    %v152 = vpop.f32.mrf.mxu0
    %153 = vmatprep.mubr.f32.mxu0 0.0
    %v154 = vand.u32 %v41, 4294901760
    %v155 = vsub.f32 %v41, %v154
    %v156 = vand.u32 %v155, 4294901760
    %v157 = vsub.f32 %v155, %v156
    %v158 = vand.u32 %v157, 4294901760
    %159 = vmatmul.mubr.f32.gmra.mxu0 %v158
    %v160 = vpop.f32.mrf.mxu0
    %v161 = vadd.f32 0.0, %v160
    %v162 = vpop.f32.mrf.mxu0
    %163 = vmatprep.mubr.f32.mxu0 0.0
    %v164 = vand.u32 %v42, 4294901760
    %v165 = vsub.f32 %v42, %v164
    %v166 = vand.u32 %v165, 4294901760
    %v167 = vsub.f32 %v165, %v166
    %v168 = vand.u32 %v167, 4294901760
    %169 = vmatmul.mubr.f32.gmra.mxu0 %v168
    %v170 = vpop.f32.mrf.mxu0
    %v171 = vadd.f32 0.0, %v170
    %v172 = vpop.f32.mrf.mxu0
    %173 = vmatprep.mubr.f32.mxu0 0.0
    %v174 = vand.u32 %v43, 4294901760
    %v175 = vsub.f32 %v43, %v174
    %v176 = vand.u32 %v175, 4294901760
    %v177 = vsub.f32 %v175, %v176
    %v178 = vand.u32 %v177, 4294901760
    %179 = vmatmul.mubr.f32.gmra.mxu0 %v178
    %v180 = vpop.f32.mrf.mxu0
    %v181 = vadd.f32 0.0, %v180
    %v182 = vpop.f32.mrf.mxu0
    %183 = vmatprep.mubr.f32.mxu0 0.0
    %v184 = vand.u32 %v44, 4294901760
    %v185 = vsub.f32 %v44, %v184
    %v186 = vand.u32 %v185, 4294901760
    %v187 = vsub.f32 %v185, %v186
    %v188 = vand.u32 %v187, 4294901760
    %189 = vmatmul.mubr.f32.gmra.mxu0 %v188
    %v190 = vpop.f32.mrf.mxu0
    %v191 = vadd.f32 0.0, %v190
    %v192 = vpop.f32.mrf.mxu0
    %193 = vmatprep.mubr.f32.mxu0 0.0
    %v194 = vand.u32 %v45, 4294901760
    %v195 = vsub.f32 %v45, %v194
    %v196 = vand.u32 %v195, 4294901760
    %v197 = vsub.f32 %v195, %v196
    %v198 = vand.u32 %v197, 4294901760
    %199 = vmatmul.mubr.f32.gmra.mxu0 %v198
    %v200 = vpop.f32.mrf.mxu0
    %v201 = vadd.f32 0.0, %v200
    %v202 = vpop.f32.mrf.mxu0
    %203 = vmatprep.mubr.f32.mxu0 0.0
    %v204 = vand.u32 %v46, 4294901760
    %v205 = vsub.f32 %v46, %v204
    %v206 = vand.u32 %v205, 4294901760
    %v207 = vsub.f32 %v205, %v206
    %v208 = vand.u32 %v207, 4294901760
    %209 = vmatmul.mubr.f32.gmra.mxu0 %v208
    %v210 = vpop.f32.mrf.mxu0
    %v211 = vadd.f32 0.0, %v210
    %v212 = vpop.f32.mrf.mxu0
    %213 = vdwg.mxu0
    %214 = vmatprep.subr.mxu0 0.0
    %v215 = vand.u32 %v62, 4294901760
    %v216 = vsub.f32 %v62, %v215
    %v217 = vand.u32 %v216, 4294901760
    %v218 = vsub.f32 %v216, %v217
    %v219 = vand.u32 %v218, 4294901760
    %220 = vmatpush1.msra.mxu0 %v219
    %221 = vmatprep.subr.mxu0 0.0
    %v222 = vand.u32 %v61, 4294901760
    %v223 = vsub.f32 %v61, %v222
    %v224 = vand.u32 %v223, 4294901760
    %v225 = vsub.f32 %v223, %v224
    %v226 = vand.u32 %v225, 4294901760
    %227 = vmatpush1.msra.mxu0 %v226
    %228 = vmatprep.subr.mxu0 0.0
    %v229 = vand.u32 %v60, 4294901760
    %v230 = vsub.f32 %v60, %v229
    %v231 = vand.u32 %v230, 4294901760
    %v232 = vsub.f32 %v230, %v231
    %v233 = vand.u32 %v232, 4294901760
    %234 = vmatpush1.msra.mxu0 %v233
    %235 = vmatprep.subr.mxu0 0.0
    %v236 = vand.u32 %v59, 4294901760
    %v237 = vsub.f32 %v59, %v236
    %v238 = vand.u32 %v237, 4294901760
    %v239 = vsub.f32 %v237, %v238
    %v240 = vand.u32 %v239, 4294901760
    %241 = vmatpush1.msra.mxu0 %v240
    %242 = vmatprep.subr.mxu0 0.0
    %v243 = vand.u32 %v58, 4294901760
    %v244 = vsub.f32 %v58, %v243
    %v245 = vand.u32 %v244, 4294901760
    %v246 = vsub.f32 %v244, %v245
    %v247 = vand.u32 %v246, 4294901760
    %248 = vmatpush1.msra.mxu0 %v247
    %249 = vmatprep.subr.mxu0 0.0
    %v250 = vand.u32 %v57, 4294901760
    %v251 = vsub.f32 %v57, %v250
    %v252 = vand.u32 %v251, 4294901760
    %v253 = vsub.f32 %v251, %v252
    %v254 = vand.u32 %v253, 4294901760
    %255 = vmatpush1.msra.mxu0 %v254
    %256 = vmatprep.subr.mxu0 0.0
    %v257 = vand.u32 %v56, 4294901760
    %v258 = vsub.f32 %v56, %v257
    %v259 = vand.u32 %v258, 4294901760
    %v260 = vsub.f32 %v258, %v259
    %v261 = vand.u32 %v260, 4294901760
    %262 = vmatpush1.msra.mxu0 %v261
    %263 = vmatprep.subr.mxu0 0.0
    %v264 = vand.u32 %v55, 4294901760
    %v265 = vsub.f32 %v55, %v264
    %v266 = vand.u32 %v265, 4294901760
    %v267 = vsub.f32 %v265, %v266
    %v268 = vand.u32 %v267, 4294901760
    %269 = vmatpush1.msra.mxu0 %v268
    %270 = vmatprep.subr.mxu0 0.0
    %v271 = vand.u32 %v54, 4294901760
    %v272 = vsub.f32 %v54, %v271
    %v273 = vand.u32 %v272, 4294901760
    %v274 = vsub.f32 %v272, %v273
    %v275 = vand.u32 %v274, 4294901760
    %276 = vmatpush1.msra.mxu0 %v275
    %277 = vmatprep.subr.mxu0 0.0
    %v278 = vand.u32 %v53, 4294901760
    %v279 = vsub.f32 %v53, %v278
    %v280 = vand.u32 %v279, 4294901760
    %v281 = vsub.f32 %v279, %v280
    %v282 = vand.u32 %v281, 4294901760
    %283 = vmatpush1.msra.mxu0 %v282
    %284 = vmatprep.subr.mxu0 0.0
    %v285 = vand.u32 %v52, 4294901760
    %v286 = vsub.f32 %v52, %v285
    %v287 = vand.u32 %v286, 4294901760
    %v288 = vsub.f32 %v286, %v287
    %v289 = vand.u32 %v288, 4294901760
    %290 = vmatpush1.msra.mxu0 %v289
    %291 = vmatprep.subr.mxu0 0.0
    %v292 = vand.u32 %v51, 4294901760
    %v293 = vsub.f32 %v51, %v292
    %v294 = vand.u32 %v293, 4294901760
    %v295 = vsub.f32 %v293, %v294
    %v296 = vand.u32 %v295, 4294901760
    %297 = vmatpush1.msra.mxu0 %v296
    %298 = vmatprep.subr.mxu0 0.0
    %v299 = vand.u32 %v50, 4294901760
    %v300 = vsub.f32 %v50, %v299
    %v301 = vand.u32 %v300, 4294901760
    %v302 = vsub.f32 %v300, %v301
    %v303 = vand.u32 %v302, 4294901760
    %304 = vmatpush1.msra.mxu0 %v303
    %305 = vmatprep.subr.mxu0 0.0
    %v306 = vand.u32 %v49, 4294901760
    %v307 = vsub.f32 %v49, %v306
    %v308 = vand.u32 %v307, 4294901760
    %v309 = vsub.f32 %v307, %v308
    %v310 = vand.u32 %v309, 4294901760
    %311 = vmatpush1.msra.mxu0 %v310
    %312 = vmatprep.subr.mxu0 0.0
    %v313 = vand.u32 %v48, 4294901760
    %v314 = vsub.f32 %v48, %v313
    %v315 = vand.u32 %v314, 4294901760
    %v316 = vsub.f32 %v314, %v315
    %v317 = vand.u32 %v316, 4294901760
    %318 = vmatpush1.msra.mxu0 %v317
    %319 = vmatprep.subr.mxu0 0.0
    %v320 = vand.u32 %v47, 4294901760
    %v321 = vsub.f32 %v47, %v320
    %v322 = vand.u32 %v321, 4294901760
    %v323 = vsub.f32 %v321, %v322
    %v324 = vand.u32 %v323, 4294901760
    %325 = vmatpush1.msra.mxu0 %v324
    %326 = vmatprep.subr.mxu0 0.0
    %327 = vmatpush2.msra.mxu0 0.0
    %328 = vmatprep.subr.mxu0 0.0
    %329 = vmatpush2.msra.mxu0 0.0
    %330 = vmatprep.subr.mxu0 0.0
    %331 = vmatpush2.msra.mxu0 0.0
    %332 = vmatprep.subr.mxu0 0.0
    %333 = vmatpush2.msra.mxu0 0.0
    %334 = vmatprep.subr.mxu0 0.0
    %335 = vmatpush2.msra.mxu0 0.0
    %336 = vmatprep.subr.mxu0 0.0
    %337 = vmatpush2.msra.mxu0 0.0
    %338 = vmatprep.subr.mxu0 0.0
    %339 = vmatpush2.msra.mxu0 0.0
    %340 = vmatprep.subr.mxu0 0.0
    %341 = vmatpush2.msra.mxu0 0.0
    %342 = vmatprep.subr.mxu0 0.0
    %343 = vmatpush2.msra.mxu0 0.0
    %344 = vmatprep.subr.mxu0 0.0
    %345 = vmatpush2.msra.mxu0 0.0
    %346 = vmatprep.subr.mxu0 0.0
    %347 = vmatpush2.msra.mxu0 0.0
    %348 = vmatprep.subr.mxu0 0.0
    %349 = vmatpush2.msra.mxu0 0.0
    %350 = vmatprep.subr.mxu0 0.0
    %351 = vmatpush2.msra.mxu0 0.0
    %352 = vmatprep.subr.mxu0 0.0
    %353 = vmatpush2.msra.mxu0 0.0
    %354 = vmatprep.subr.mxu0 0.0
    %355 = vmatpush2.msra.mxu0 0.0
    %356 = vmatprep.subr.mxu0 0.0
    %357 = vmatpush2.msra.mxu0 0.0
    %358 = vmatprep.mubr.f32.mxu0 0.0
    %v359 = vand.u32 %v40, 4294901760
    %360 = vmatmul.mubr.f32.gmra.mxu0 %v359
    %v361 = vpop.f32.mrf.mxu0
    %v362 = vadd.f32 %v151, %v361
    %v363 = vpop.f32.mrf.mxu0
    %364 = vmatprep.mubr.f32.mxu0 0.0
    %v365 = vand.u32 %v41, 4294901760
    %366 = vmatmul.mubr.f32.gmra.mxu0 %v365
    %v367 = vpop.f32.mrf.mxu0
    %v368 = vadd.f32 %v161, %v367
    %v369 = vpop.f32.mrf.mxu0
    %370 = vmatprep.mubr.f32.mxu0 0.0
    %v371 = vand.u32 %v42, 4294901760
    %372 = vmatmul.mubr.f32.gmra.mxu0 %v371
    %v373 = vpop.f32.mrf.mxu0
    %v374 = vadd.f32 %v171, %v373
    %v375 = vpop.f32.mrf.mxu0
    %376 = vmatprep.mubr.f32.mxu0 0.0
    %v377 = vand.u32 %v43, 4294901760
    %378 = vmatmul.mubr.f32.gmra.mxu0 %v377
    %v379 = vpop.f32.mrf.mxu0
    %v380 = vadd.f32 %v181, %v379
    %v381 = vpop.f32.mrf.mxu0
    %382 = vmatprep.mubr.f32.mxu0 0.0
    %v383 = vand.u32 %v44, 4294901760
    %384 = vmatmul.mubr.f32.gmra.mxu0 %v383
    %v385 = vpop.f32.mrf.mxu0
    %v386 = vadd.f32 %v191, %v385
    %v387 = vpop.f32.mrf.mxu0
    %388 = vmatprep.mubr.f32.mxu0 0.0
    %v389 = vand.u32 %v45, 4294901760
    %390 = vmatmul.mubr.f32.gmra.mxu0 %v389
    %v391 = vpop.f32.mrf.mxu0
    %v392 = vadd.f32 %v201, %v391
    %v393 = vpop.f32.mrf.mxu0
    %394 = vmatprep.mubr.f32.mxu0 0.0
    %v395 = vand.u32 %v46, 4294901760
    %396 = vmatmul.mubr.f32.gmra.mxu0 %v395
    %v397 = vpop.f32.mrf.mxu0
    %v398 = vadd.f32 %v211, %v397
    %v399 = vpop.f32.mrf.mxu0
    %400 = vdwg.mxu0
    %401 = vmatprep.subr.mxu0 0.0
    %v402 = vand.u32 %v62, 4294901760
    %v403 = vsub.f32 %v62, %v402
    %404 = vmatpush1.msra.mxu0 %v403
    %405 = vmatprep.subr.mxu0 0.0
    %v406 = vand.u32 %v61, 4294901760
    %v407 = vsub.f32 %v61, %v406
    %408 = vmatpush1.msra.mxu0 %v407
    %409 = vmatprep.subr.mxu0 0.0
    %v410 = vand.u32 %v60, 4294901760
    %v411 = vsub.f32 %v60, %v410
    %412 = vmatpush1.msra.mxu0 %v411
    %413 = vmatprep.subr.mxu0 0.0
    %v414 = vand.u32 %v59, 4294901760
    %v415 = vsub.f32 %v59, %v414
    %416 = vmatpush1.msra.mxu0 %v415
    %417 = vmatprep.subr.mxu0 0.0
    %v418 = vand.u32 %v58, 4294901760
    %v419 = vsub.f32 %v58, %v418
    %420 = vmatpush1.msra.mxu0 %v419
    %421 = vmatprep.subr.mxu0 0.0
    %v422 = vand.u32 %v57, 4294901760
    %v423 = vsub.f32 %v57, %v422
    %424 = vmatpush1.msra.mxu0 %v423
    %425 = vmatprep.subr.mxu0 0.0
    %v426 = vand.u32 %v56, 4294901760
    %v427 = vsub.f32 %v56, %v426
    %428 = vmatpush1.msra.mxu0 %v427
    %429 = vmatprep.subr.mxu0 0.0
    %v430 = vand.u32 %v55, 4294901760
    %v431 = vsub.f32 %v55, %v430
    %432 = vmatpush1.msra.mxu0 %v431
    %433 = vmatprep.subr.mxu0 0.0
    %v434 = vand.u32 %v54, 4294901760
    %v435 = vsub.f32 %v54, %v434
    %436 = vmatpush1.msra.mxu0 %v435
    %437 = vmatprep.subr.mxu0 0.0
    %v438 = vand.u32 %v53, 4294901760
    %v439 = vsub.f32 %v53, %v438
    %440 = vmatpush1.msra.mxu0 %v439
    %441 = vmatprep.subr.mxu0 0.0
    %v442 = vand.u32 %v52, 4294901760
    %v443 = vsub.f32 %v52, %v442
    %444 = vmatpush1.msra.mxu0 %v443
    %445 = vmatprep.subr.mxu0 0.0
    %v446 = vand.u32 %v51, 4294901760
    %v447 = vsub.f32 %v51, %v446
    %448 = vmatpush1.msra.mxu0 %v447
    %449 = vmatprep.subr.mxu0 0.0
    %v450 = vand.u32 %v50, 4294901760
    %v451 = vsub.f32 %v50, %v450
    %452 = vmatpush1.msra.mxu0 %v451
    %453 = vmatprep.subr.mxu0 0.0
    %v454 = vand.u32 %v49, 4294901760
    %v455 = vsub.f32 %v49, %v454
    %456 = vmatpush1.msra.mxu0 %v455
    %457 = vmatprep.subr.mxu0 0.0
    %v458 = vand.u32 %v48, 4294901760
    %v459 = vsub.f32 %v48, %v458
    %460 = vmatpush1.msra.mxu0 %v459
    %461 = vmatprep.subr.mxu0 0.0
    %v462 = vand.u32 %v47, 4294901760
    %v463 = vsub.f32 %v47, %v462
    %464 = vmatpush1.msra.mxu0 %v463
    %465 = vmatprep.subr.mxu0 0.0
    %466 = vmatpush2.msra.mxu0 0.0
    %467 = vmatprep.subr.mxu0 0.0
    %468 = vmatpush2.msra.mxu0 0.0
    %469 = vmatprep.subr.mxu0 0.0
    %470 = vmatpush2.msra.mxu0 0.0
    %471 = vmatprep.subr.mxu0 0.0
    %472 = vmatpush2.msra.mxu0 0.0
    %473 = vmatprep.subr.mxu0 0.0
    %474 = vmatpush2.msra.mxu0 0.0
    %475 = vmatprep.subr.mxu0 0.0
    %476 = vmatpush2.msra.mxu0 0.0
    %477 = vmatprep.subr.mxu0 0.0
    %478 = vmatpush2.msra.mxu0 0.0
    %479 = vmatprep.subr.mxu0 0.0
    %480 = vmatpush2.msra.mxu0 0.0
    %481 = vmatprep.subr.mxu0 0.0
    %482 = vmatpush2.msra.mxu0 0.0
    %483 = vmatprep.subr.mxu0 0.0
    %484 = vmatpush2.msra.mxu0 0.0
    %485 = vmatprep.subr.mxu0 0.0
    %486 = vmatpush2.msra.mxu0 0.0
    %487 = vmatprep.subr.mxu0 0.0
    %488 = vmatpush2.msra.mxu0 0.0
    %489 = vmatprep.subr.mxu0 0.0
    %490 = vmatpush2.msra.mxu0 0.0
    %491 = vmatprep.subr.mxu0 0.0
    %492 = vmatpush2.msra.mxu0 0.0
    %493 = vmatprep.subr.mxu0 0.0
    %494 = vmatpush2.msra.mxu0 0.0
    %495 = vmatprep.subr.mxu0 0.0
    %496 = vmatpush2.msra.mxu0 0.0
    %497 = vmatprep.mubr.f32.mxu0 0.0
    %v498 = vand.u32 %v40, 4294901760
    %v499 = vsub.f32 %v40, %v498
    %500 = vmatmul.mubr.f32.gmra.mxu0 %v499
    %v501 = vpop.f32.mrf.mxu0
    %v502 = vadd.f32 %v362, %v501
    %v503 = vpop.f32.mrf.mxu0
    %504 = vmatprep.mubr.f32.mxu0 0.0
    %v505 = vand.u32 %v41, 4294901760
    %v506 = vsub.f32 %v41, %v505
    %507 = vmatmul.mubr.f32.gmra.mxu0 %v506
    %v508 = vpop.f32.mrf.mxu0
    %v509 = vadd.f32 %v368, %v508
    %v510 = vpop.f32.mrf.mxu0
    %511 = vmatprep.mubr.f32.mxu0 0.0
    %v512 = vand.u32 %v42, 4294901760
    %v513 = vsub.f32 %v42, %v512
    %514 = vmatmul.mubr.f32.gmra.mxu0 %v513
    %v515 = vpop.f32.mrf.mxu0
    %v516 = vadd.f32 %v374, %v515
    %v517 = vpop.f32.mrf.mxu0
    %518 = vmatprep.mubr.f32.mxu0 0.0
    %v519 = vand.u32 %v43, 4294901760
    %v520 = vsub.f32 %v43, %v519
    %521 = vmatmul.mubr.f32.gmra.mxu0 %v520
    %v522 = vpop.f32.mrf.mxu0
    %v523 = vadd.f32 %v380, %v522
    %v524 = vpop.f32.mrf.mxu0
    %525 = vmatprep.mubr.f32.mxu0 0.0
    %v526 = vand.u32 %v44, 4294901760
    %v527 = vsub.f32 %v44, %v526
    %528 = vmatmul.mubr.f32.gmra.mxu0 %v527
    %v529 = vpop.f32.mrf.mxu0
    %v530 = vadd.f32 %v386, %v529
    %v531 = vpop.f32.mrf.mxu0
    %532 = vmatprep.mubr.f32.mxu0 0.0
    %v533 = vand.u32 %v45, 4294901760
    %v534 = vsub.f32 %v45, %v533
    %535 = vmatmul.mubr.f32.gmra.mxu0 %v534
    %v536 = vpop.f32.mrf.mxu0
    %v537 = vadd.f32 %v392, %v536
    %v538 = vpop.f32.mrf.mxu0
    %539 = vmatprep.mubr.f32.mxu0 0.0
    %v540 = vand.u32 %v46, 4294901760
    %v541 = vsub.f32 %v46, %v540
    %542 = vmatmul.mubr.f32.gmra.mxu0 %v541
    %v543 = vpop.f32.mrf.mxu0
    %v544 = vadd.f32 %v398, %v543
    %v545 = vpop.f32.mrf.mxu0
    %546 = vdwg.mxu0
    %547 = vmatprep.subr.mxu0 0.0
    %v548 = vand.u32 %v62, 4294901760
    %549 = vmatpush1.msra.mxu0 %v548
    %550 = vmatprep.subr.mxu0 0.0
    %v551 = vand.u32 %v61, 4294901760
    %552 = vmatpush1.msra.mxu0 %v551
    %553 = vmatprep.subr.mxu0 0.0
    %v554 = vand.u32 %v60, 4294901760
    %555 = vmatpush1.msra.mxu0 %v554
    %556 = vmatprep.subr.mxu0 0.0
    %v557 = vand.u32 %v59, 4294901760
    %558 = vmatpush1.msra.mxu0 %v557
    %559 = vmatprep.subr.mxu0 0.0
    %v560 = vand.u32 %v58, 4294901760
    %561 = vmatpush1.msra.mxu0 %v560
    %562 = vmatprep.subr.mxu0 0.0
    %v563 = vand.u32 %v57, 4294901760
    %564 = vmatpush1.msra.mxu0 %v563
    %565 = vmatprep.subr.mxu0 0.0
    %v566 = vand.u32 %v56, 4294901760
    %567 = vmatpush1.msra.mxu0 %v566
    %568 = vmatprep.subr.mxu0 0.0
    %v569 = vand.u32 %v55, 4294901760
    %570 = vmatpush1.msra.mxu0 %v569
    %571 = vmatprep.subr.mxu0 0.0
    %v572 = vand.u32 %v54, 4294901760
    %573 = vmatpush1.msra.mxu0 %v572
    %574 = vmatprep.subr.mxu0 0.0
    %v575 = vand.u32 %v53, 4294901760
    %576 = vmatpush1.msra.mxu0 %v575
    %577 = vmatprep.subr.mxu0 0.0
    %v578 = vand.u32 %v52, 4294901760
    %579 = vmatpush1.msra.mxu0 %v578
    %580 = vmatprep.subr.mxu0 0.0
    %v581 = vand.u32 %v51, 4294901760
    %582 = vmatpush1.msra.mxu0 %v581
    %583 = vmatprep.subr.mxu0 0.0
    %v584 = vand.u32 %v50, 4294901760
    %585 = vmatpush1.msra.mxu0 %v584
    %586 = vmatprep.subr.mxu0 0.0
    %v587 = vand.u32 %v49, 4294901760
    %588 = vmatpush1.msra.mxu0 %v587
    %589 = vmatprep.subr.mxu0 0.0
    %v590 = vand.u32 %v48, 4294901760
    %591 = vmatpush1.msra.mxu0 %v590
    %592 = vmatprep.subr.mxu0 0.0
    %v593 = vand.u32 %v47, 4294901760
    %594 = vmatpush1.msra.mxu0 %v593
    %595 = vmatprep.subr.mxu0 0.0
    %596 = vmatpush2.msra.mxu0 0.0
    %597 = vmatprep.subr.mxu0 0.0
    %598 = vmatpush2.msra.mxu0 0.0
    %599 = vmatprep.subr.mxu0 0.0
    %600 = vmatpush2.msra.mxu0 0.0
    %601 = vmatprep.subr.mxu0 0.0
    %602 = vmatpush2.msra.mxu0 0.0
    %603 = vmatprep.subr.mxu0 0.0
    %604 = vmatpush2.msra.mxu0 0.0
    %605 = vmatprep.subr.mxu0 0.0
    %606 = vmatpush2.msra.mxu0 0.0
    %607 = vmatprep.subr.mxu0 0.0
    %608 = vmatpush2.msra.mxu0 0.0
    %609 = vmatprep.subr.mxu0 0.0
    %610 = vmatpush2.msra.mxu0 0.0
    %611 = vmatprep.subr.mxu0 0.0
    %612 = vmatpush2.msra.mxu0 0.0
    %613 = vmatprep.subr.mxu0 0.0
    %614 = vmatpush2.msra.mxu0 0.0
    %615 = vmatprep.subr.mxu0 0.0
    %616 = vmatpush2.msra.mxu0 0.0
    %617 = vmatprep.subr.mxu0 0.0
    %618 = vmatpush2.msra.mxu0 0.0
    %619 = vmatprep.subr.mxu0 0.0
    %620 = vmatpush2.msra.mxu0 0.0
    %621 = vmatprep.subr.mxu0 0.0
    %622 = vmatpush2.msra.mxu0 0.0
    %623 = vmatprep.subr.mxu0 0.0
    %624 = vmatpush2.msra.mxu0 0.0
    %625 = vmatprep.subr.mxu0 0.0
    %626 = vmatpush2.msra.mxu0 0.0
    %627 = vmatprep.mubr.f32.mxu0 0.0
    %v628 = vand.u32 %v40, 4294901760
    %v629 = vsub.f32 %v40, %v628
    %v630 = vand.u32 %v629, 4294901760
    %631 = vmatmul.mubr.f32.gmra.mxu0 %v630
    %v632 = vpop.f32.mrf.mxu0
    %v633 = vadd.f32 %v502, %v632
    %v634 = vpop.f32.mrf.mxu0
    %635 = vmatprep.mubr.f32.mxu0 0.0
    %v636 = vand.u32 %v41, 4294901760
    %v637 = vsub.f32 %v41, %v636
    %v638 = vand.u32 %v637, 4294901760
    %639 = vmatmul.mubr.f32.gmra.mxu0 %v638
    %v640 = vpop.f32.mrf.mxu0
    %v641 = vadd.f32 %v509, %v640
    %v642 = vpop.f32.mrf.mxu0
    %643 = vmatprep.mubr.f32.mxu0 0.0
    %v644 = vand.u32 %v42, 4294901760
    %v645 = vsub.f32 %v42, %v644
    %v646 = vand.u32 %v645, 4294901760
    %647 = vmatmul.mubr.f32.gmra.mxu0 %v646
    %v648 = vpop.f32.mrf.mxu0
    %v649 = vadd.f32 %v516, %v648
    %v650 = vpop.f32.mrf.mxu0
    %651 = vmatprep.mubr.f32.mxu0 0.0
    %v652 = vand.u32 %v43, 4294901760
    %v653 = vsub.f32 %v43, %v652
    %v654 = vand.u32 %v653, 4294901760
    %655 = vmatmul.mubr.f32.gmra.mxu0 %v654
    %v656 = vpop.f32.mrf.mxu0
    %v657 = vadd.f32 %v523, %v656
    %v658 = vpop.f32.mrf.mxu0
    %659 = vmatprep.mubr.f32.mxu0 0.0
    %v660 = vand.u32 %v44, 4294901760
    %v661 = vsub.f32 %v44, %v660
    %v662 = vand.u32 %v661, 4294901760
    %663 = vmatmul.mubr.f32.gmra.mxu0 %v662
    %v664 = vpop.f32.mrf.mxu0
    %v665 = vadd.f32 %v530, %v664
    %v666 = vpop.f32.mrf.mxu0
    %667 = vmatprep.mubr.f32.mxu0 0.0
    %v668 = vand.u32 %v45, 4294901760
    %v669 = vsub.f32 %v45, %v668
    %v670 = vand.u32 %v669, 4294901760
    %671 = vmatmul.mubr.f32.gmra.mxu0 %v670
    %v672 = vpop.f32.mrf.mxu0
    %v673 = vadd.f32 %v537, %v672
    %v674 = vpop.f32.mrf.mxu0
    %675 = vmatprep.mubr.f32.mxu0 0.0
    %v676 = vand.u32 %v46, 4294901760
    %v677 = vsub.f32 %v46, %v676
    %v678 = vand.u32 %v677, 4294901760
    %679 = vmatmul.mubr.f32.gmra.mxu0 %v678
    %v680 = vpop.f32.mrf.mxu0
    %v681 = vadd.f32 %v544, %v680
    %v682 = vpop.f32.mrf.mxu0
    %683 = vdwg.mxu0
    %684 = vmatprep.subr.mxu0 0.0
    %v685 = vand.u32 %v62, 4294901760
    %v686 = vsub.f32 %v62, %v685
    %v687 = vand.u32 %v686, 4294901760
    %688 = vmatpush1.msra.mxu0 %v687
    %689 = vmatprep.subr.mxu0 0.0
    %v690 = vand.u32 %v61, 4294901760
    %v691 = vsub.f32 %v61, %v690
    %v692 = vand.u32 %v691, 4294901760
    %693 = vmatpush1.msra.mxu0 %v692
    %694 = vmatprep.subr.mxu0 0.0
    %v695 = vand.u32 %v60, 4294901760
    %v696 = vsub.f32 %v60, %v695
    %v697 = vand.u32 %v696, 4294901760
    %698 = vmatpush1.msra.mxu0 %v697
    %699 = vmatprep.subr.mxu0 0.0
    %v700 = vand.u32 %v59, 4294901760
    %v701 = vsub.f32 %v59, %v700
    %v702 = vand.u32 %v701, 4294901760
    %703 = vmatpush1.msra.mxu0 %v702
    %704 = vmatprep.subr.mxu0 0.0
    %v705 = vand.u32 %v58, 4294901760
    %v706 = vsub.f32 %v58, %v705
    %v707 = vand.u32 %v706, 4294901760
    %708 = vmatpush1.msra.mxu0 %v707
    %709 = vmatprep.subr.mxu0 0.0
    %v710 = vand.u32 %v57, 4294901760
    %v711 = vsub.f32 %v57, %v710
    %v712 = vand.u32 %v711, 4294901760
    %713 = vmatpush1.msra.mxu0 %v712
    %714 = vmatprep.subr.mxu0 0.0
    %v715 = vand.u32 %v56, 4294901760
    %v716 = vsub.f32 %v56, %v715
    %v717 = vand.u32 %v716, 4294901760
    %718 = vmatpush1.msra.mxu0 %v717
    %719 = vmatprep.subr.mxu0 0.0
    %v720 = vand.u32 %v55, 4294901760
    %v721 = vsub.f32 %v55, %v720
    %v722 = vand.u32 %v721, 4294901760
    %723 = vmatpush1.msra.mxu0 %v722
    %724 = vmatprep.subr.mxu0 0.0
    %v725 = vand.u32 %v54, 4294901760
    %v726 = vsub.f32 %v54, %v725
    %v727 = vand.u32 %v726, 4294901760
    %728 = vmatpush1.msra.mxu0 %v727
    %729 = vmatprep.subr.mxu0 0.0
    %v730 = vand.u32 %v53, 4294901760
    %v731 = vsub.f32 %v53, %v730
    %v732 = vand.u32 %v731, 4294901760
    %733 = vmatpush1.msra.mxu0 %v732
    %734 = vmatprep.subr.mxu0 0.0
    %v735 = vand.u32 %v52, 4294901760
    %v736 = vsub.f32 %v52, %v735
    %v737 = vand.u32 %v736, 4294901760
    %738 = vmatpush1.msra.mxu0 %v737
    %739 = vmatprep.subr.mxu0 0.0
    %v740 = vand.u32 %v51, 4294901760
    %v741 = vsub.f32 %v51, %v740
    %v742 = vand.u32 %v741, 4294901760
    %743 = vmatpush1.msra.mxu0 %v742
    %744 = vmatprep.subr.mxu0 0.0
    %v745 = vand.u32 %v50, 4294901760
    %v746 = vsub.f32 %v50, %v745
    %v747 = vand.u32 %v746, 4294901760
    %748 = vmatpush1.msra.mxu0 %v747
    %749 = vmatprep.subr.mxu0 0.0
    %v750 = vand.u32 %v49, 4294901760
    %v751 = vsub.f32 %v49, %v750
    %v752 = vand.u32 %v751, 4294901760
    %753 = vmatpush1.msra.mxu0 %v752
    %754 = vmatprep.subr.mxu0 0.0
    %v755 = vand.u32 %v48, 4294901760
    %v756 = vsub.f32 %v48, %v755
    %v757 = vand.u32 %v756, 4294901760
    %758 = vmatpush1.msra.mxu0 %v757
    %759 = vmatprep.subr.mxu0 0.0
    %v760 = vand.u32 %v47, 4294901760
    %v761 = vsub.f32 %v47, %v760
    %v762 = vand.u32 %v761, 4294901760
    %763 = vmatpush1.msra.mxu0 %v762
    %764 = vmatprep.subr.mxu0 0.0
    %765 = vmatpush2.msra.mxu0 0.0
    %766 = vmatprep.subr.mxu0 0.0
    %767 = vmatpush2.msra.mxu0 0.0
    %768 = vmatprep.subr.mxu0 0.0
    %769 = vmatpush2.msra.mxu0 0.0
    %770 = vmatprep.subr.mxu0 0.0
    %771 = vmatpush2.msra.mxu0 0.0
    %772 = vmatprep.subr.mxu0 0.0
    %773 = vmatpush2.msra.mxu0 0.0
    %774 = vmatprep.subr.mxu0 0.0
    %775 = vmatpush2.msra.mxu0 0.0
    %776 = vmatprep.subr.mxu0 0.0
    %777 = vmatpush2.msra.mxu0 0.0
    %778 = vmatprep.subr.mxu0 0.0
    %779 = vmatpush2.msra.mxu0 0.0
    %780 = vmatprep.subr.mxu0 0.0
    %781 = vmatpush2.msra.mxu0 0.0
    %782 = vmatprep.subr.mxu0 0.0
    %783 = vmatpush2.msra.mxu0 0.0
    %784 = vmatprep.subr.mxu0 0.0
    %785 = vmatpush2.msra.mxu0 0.0
    %786 = vmatprep.subr.mxu0 0.0
    %787 = vmatpush2.msra.mxu0 0.0
    %788 = vmatprep.subr.mxu0 0.0
    %789 = vmatpush2.msra.mxu0 0.0
    %790 = vmatprep.subr.mxu0 0.0
    %791 = vmatpush2.msra.mxu0 0.0
    %792 = vmatprep.subr.mxu0 0.0
    %793 = vmatpush2.msra.mxu0 0.0
    %794 = vmatprep.subr.mxu0 0.0
    %795 = vmatpush2.msra.mxu0 0.0
    %796 = vmatprep.mubr.f32.mxu0 0.0
    %v797 = vand.u32 %v40, 4294901760
    %798 = vmatmul.mubr.f32.gmra.mxu0 %v797
    %v799 = vpop.f32.mrf.mxu0
    %v800 = vadd.f32 %v633, %v799
    %v801 = vpop.f32.mrf.mxu0
    %802 = vmatprep.mubr.f32.mxu0 0.0
    %v803 = vand.u32 %v41, 4294901760
    %804 = vmatmul.mubr.f32.gmra.mxu0 %v803
    %v805 = vpop.f32.mrf.mxu0
    %v806 = vadd.f32 %v641, %v805
    %v807 = vpop.f32.mrf.mxu0
    %808 = vmatprep.mubr.f32.mxu0 0.0
    %v809 = vand.u32 %v42, 4294901760
    %810 = vmatmul.mubr.f32.gmra.mxu0 %v809
    %v811 = vpop.f32.mrf.mxu0
    %v812 = vadd.f32 %v649, %v811
    %v813 = vpop.f32.mrf.mxu0
    %814 = vmatprep.mubr.f32.mxu0 0.0
    %v815 = vand.u32 %v43, 4294901760
    %816 = vmatmul.mubr.f32.gmra.mxu0 %v815
    %v817 = vpop.f32.mrf.mxu0
    %v818 = vadd.f32 %v657, %v817
    %v819 = vpop.f32.mrf.mxu0
    %820 = vmatprep.mubr.f32.mxu0 0.0
    %v821 = vand.u32 %v44, 4294901760
    %822 = vmatmul.mubr.f32.gmra.mxu0 %v821
    %v823 = vpop.f32.mrf.mxu0
    %v824 = vadd.f32 %v665, %v823
    %v825 = vpop.f32.mrf.mxu0
    %826 = vmatprep.mubr.f32.mxu0 0.0
    %v827 = vand.u32 %v45, 4294901760
    %828 = vmatmul.mubr.f32.gmra.mxu0 %v827
    %v829 = vpop.f32.mrf.mxu0
    %v830 = vadd.f32 %v673, %v829
    %v831 = vpop.f32.mrf.mxu0
    %832 = vmatprep.mubr.f32.mxu0 0.0
    %v833 = vand.u32 %v46, 4294901760
    %834 = vmatmul.mubr.f32.gmra.mxu0 %v833
    %v835 = vpop.f32.mrf.mxu0
    %v836 = vadd.f32 %v681, %v835
    %v837 = vpop.f32.mrf.mxu0
    %838 = vdwg.mxu0
    %839 = vmatprep.subr.mxu0 0.0
    %v840 = vand.u32 %v62, 4294901760
    %841 = vmatpush1.msra.mxu0 %v840
    %842 = vmatprep.subr.mxu0 0.0
    %v843 = vand.u32 %v61, 4294901760
    %844 = vmatpush1.msra.mxu0 %v843
    %845 = vmatprep.subr.mxu0 0.0
    %v846 = vand.u32 %v60, 4294901760
    %847 = vmatpush1.msra.mxu0 %v846
    %848 = vmatprep.subr.mxu0 0.0
    %v849 = vand.u32 %v59, 4294901760
    %850 = vmatpush1.msra.mxu0 %v849
    %851 = vmatprep.subr.mxu0 0.0
    %v852 = vand.u32 %v58, 4294901760
    %853 = vmatpush1.msra.mxu0 %v852
    %854 = vmatprep.subr.mxu0 0.0
    %v855 = vand.u32 %v57, 4294901760
    %856 = vmatpush1.msra.mxu0 %v855
    %857 = vmatprep.subr.mxu0 0.0
    %v858 = vand.u32 %v56, 4294901760
    %859 = vmatpush1.msra.mxu0 %v858
    %860 = vmatprep.subr.mxu0 0.0
    %v861 = vand.u32 %v55, 4294901760
    %862 = vmatpush1.msra.mxu0 %v861
    %863 = vmatprep.subr.mxu0 0.0
    %v864 = vand.u32 %v54, 4294901760
    %865 = vmatpush1.msra.mxu0 %v864
    %866 = vmatprep.subr.mxu0 0.0
    %v867 = vand.u32 %v53, 4294901760
    %868 = vmatpush1.msra.mxu0 %v867
    %869 = vmatprep.subr.mxu0 0.0
    %v870 = vand.u32 %v52, 4294901760
    %871 = vmatpush1.msra.mxu0 %v870
    %872 = vmatprep.subr.mxu0 0.0
    %v873 = vand.u32 %v51, 4294901760
    %874 = vmatpush1.msra.mxu0 %v873
    %875 = vmatprep.subr.mxu0 0.0
    %v876 = vand.u32 %v50, 4294901760
    %877 = vmatpush1.msra.mxu0 %v876
    %878 = vmatprep.subr.mxu0 0.0
    %v879 = vand.u32 %v49, 4294901760
    %880 = vmatpush1.msra.mxu0 %v879
    %881 = vmatprep.subr.mxu0 0.0
    %v882 = vand.u32 %v48, 4294901760
    %883 = vmatpush1.msra.mxu0 %v882
    %884 = vmatprep.subr.mxu0 0.0
    %v885 = vand.u32 %v47, 4294901760
    %886 = vmatpush1.msra.mxu0 %v885
    %887 = vmatprep.subr.mxu0 0.0
    %888 = vmatpush2.msra.mxu0 0.0
    %889 = vmatprep.subr.mxu0 0.0
    %890 = vmatpush2.msra.mxu0 0.0
    %891 = vmatprep.subr.mxu0 0.0
    %892 = vmatpush2.msra.mxu0 0.0
    %893 = vmatprep.subr.mxu0 0.0
    %894 = vmatpush2.msra.mxu0 0.0
    %895 = vmatprep.subr.mxu0 0.0
    %896 = vmatpush2.msra.mxu0 0.0
    %897 = vmatprep.subr.mxu0 0.0
    %898 = vmatpush2.msra.mxu0 0.0
    %899 = vmatprep.subr.mxu0 0.0
    %900 = vmatpush2.msra.mxu0 0.0
    %901 = vmatprep.subr.mxu0 0.0
    %902 = vmatpush2.msra.mxu0 0.0
    %903 = vmatprep.subr.mxu0 0.0
    %904 = vmatpush2.msra.mxu0 0.0
    %905 = vmatprep.subr.mxu0 0.0
    %906 = vmatpush2.msra.mxu0 0.0
    %907 = vmatprep.subr.mxu0 0.0
    %908 = vmatpush2.msra.mxu0 0.0
    %909 = vmatprep.subr.mxu0 0.0
    %910 = vmatpush2.msra.mxu0 0.0
    %911 = vmatprep.subr.mxu0 0.0
    %912 = vmatpush2.msra.mxu0 0.0
    %913 = vmatprep.subr.mxu0 0.0
    %914 = vmatpush2.msra.mxu0 0.0
    %915 = vmatprep.subr.mxu0 0.0
    %916 = vmatpush2.msra.mxu0 0.0
    %917 = vmatprep.subr.mxu0 0.0
    %918 = vmatpush2.msra.mxu0 0.0
    %919 = vmatprep.mubr.f32.mxu0 0.0
    %v920 = vand.u32 %v40, 4294901760
    %921 = vmatmul.mubr.f32.gmra.mxu0 %v920
    %v922 = vpop.f32.mrf.mxu0
    %v923 = vadd.f32 %v800, %v922
    %v924 = vpop.f32.mrf.mxu0
    %925 = vmatprep.mubr.f32.mxu0 0.0
    %v926 = vand.u32 %v41, 4294901760
    %927 = vmatmul.mubr.f32.gmra.mxu0 %v926
    %v928 = vpop.f32.mrf.mxu0
    %v929 = vadd.f32 %v806, %v928
    %v930 = vpop.f32.mrf.mxu0
    %931 = vmatprep.mubr.f32.mxu0 0.0
    %v932 = vand.u32 %v42, 4294901760
    %933 = vmatmul.mubr.f32.gmra.mxu0 %v932
    %v934 = vpop.f32.mrf.mxu0
    %v935 = vadd.f32 %v812, %v934
    %v936 = vpop.f32.mrf.mxu0
    %937 = vmatprep.mubr.f32.mxu0 0.0
    %v938 = vand.u32 %v43, 4294901760
    %939 = vmatmul.mubr.f32.gmra.mxu0 %v938
    %v940 = vpop.f32.mrf.mxu0
    %v941 = vadd.f32 %v818, %v940
    %v942 = vpop.f32.mrf.mxu0
    %943 = vmatprep.mubr.f32.mxu0 0.0
    %v944 = vand.u32 %v44, 4294901760
    %945 = vmatmul.mubr.f32.gmra.mxu0 %v944
    %v946 = vpop.f32.mrf.mxu0
    %v947 = vadd.f32 %v824, %v946
    %v948 = vpop.f32.mrf.mxu0
    %949 = vmatprep.mubr.f32.mxu0 0.0
    %v950 = vand.u32 %v45, 4294901760
    %951 = vmatmul.mubr.f32.gmra.mxu0 %v950
    %v952 = vpop.f32.mrf.mxu0
    %v953 = vadd.f32 %v830, %v952
    %v954 = vpop.f32.mrf.mxu0
    %955 = vmatprep.mubr.f32.mxu0 0.0
    %v956 = vand.u32 %v46, 4294901760
    %957 = vmatmul.mubr.f32.gmra.mxu0 %v956
    %v958 = vpop.f32.mrf.mxu0
    %v959 = vadd.f32 %v836, %v958
    %v960 = vpop.f32.mrf.mxu0
    %961 = vdwg.mxu0
    %962 = vst [vmem:[#allocation7] sm:$0xff] %v923
    %963 = vst [vmem:[#allocation7 + $0x8] sm:$0xff] %v929
    %964 = vst [vmem:[#allocation7 + $0x10] sm:$0xff] %v935
    %965 = vst [vmem:[#allocation7 + $0x18] sm:$0xff] %v941
    %966 = vst [vmem:[#allocation7 + $0x20] sm:$0xff] %v947
    %967 = vst [vmem:[#allocation7 + $0x28] sm:$0xff] %v953
    %968 = vst [vmem:[#allocation7 + $0x30] sm:$0x3] %v959
    // Predicated region
    $region18: #{tpu_custom_call.1} parent=1 // pred_check
      _
    $region19: #{tpu_custom_call.1} parent=1 // pred_check_branch
      %970 = sbr.rel (0) target = $region21
    $region20: #{tpu_custom_call.1} parent=1 // pred_region
      %s972 = ssub.s32 896, 896
      %973 = vsyncadd [#allocation4], %s972
      %s974 = sshll.u32 [#allocation7], 4
      %s975 = int_to_ptr.vmem [resolvable:$true] %s974
      %980 = dma.vmem_to_hbm [thread:$0]  %s975, 896, %s2, [#allocation4], 128, 128, 8
    $region21: #{tpu_custom_call.1} parent=1 // pred_fallthru
      _
    // Predicated region
    $region22: #{tpu_custom_call.1} parent=1 // pred_check
      _
    $region23: #{tpu_custom_call.1} parent=1 // pred_check_branch
      %982 = sbr.rel (0) target = $region25
    $region24: #{tpu_custom_call.1} parent=1 // pred_region
      %983 = dma.done [#allocation4], 896
    $region25: #{tpu_custom_call.1} parent=1 // pred_fallthru
      _
    %984 = vsyncpa [#allocation3], 1
    %985 = vsyncpa [#allocation6], 1
    %986 = vsyncpa [#allocation4], 1

</llo_original>
